<compile_context>
chip_gen: v7x
topology: tpu7x:2x2x1
jax: 0.10.0
libtpu: 0.0.40
codegen_flags: <defaults>
</compile_context>

<pallas_src>
import math
from functools import partial

import jax
import jax.numpy as jnp
from jax import lax
from jax.experimental import pallas as pl
from jax.experimental.pallas import tpu as pltpu


def make_positional_encoding(dim_model: int, max_seq_len: int = 1000,
                             dtype=jnp.float32) -> jnp.ndarray:
    """Deterministic buffer, identical to the PyTorch __init__ (computed in fp32)."""
    assert dim_model % 2 == 0, "dim_model must be even (matches the PyTorch module)"
    position = jnp.arange(max_seq_len, dtype=jnp.float32)[:, None]              # (L, 1)
    div_term = jnp.exp(
        jnp.arange(0, dim_model, 2, dtype=jnp.float32) * (-math.log(10000.0) / dim_model)
    )                                                                            # (D/2,)
    pe = jnp.zeros((max_seq_len, dim_model), dtype=jnp.float32)
    pe = pe.at[:, 0::2].set(jnp.sin(position * div_term))
    pe = pe.at[:, 1::2].set(jnp.cos(position * div_term))
    return pe.astype(dtype)[:, None, :]                                          # (L, 1, D)


# ----------------------------------------------------------------------------- helpers


def _round_up(v: int, m: int) -> int:
    return ((v + m - 1) // m) * m


def _vmem_capacity_bytes() -> int:
    try:
        return int(pltpu.get_tpu_info().vmem_capacity_bytes)
    except Exception:
        return 64 << 20          # conservative fallback (v7x per-TC VMEM)


def _num_tensorcores() -> int:
    """Best-effort: v7x has 2 TensorCores per chip, v5e/v6e have 1."""
    try:
        kind = jax.devices()[0].device_kind.lower()
        return 2 if "7" in kind else 1
    except Exception:
        return 1


def _choose_tiling(S: int, B: int, D: int, itemsize: int,
                   tile_budget: int, num_tcs: int):
    """Returns (rows_per_block, batches_per_block, sublane_pack)."""
    pack = 8 * max(1, 4 // itemsize)          # 8 fp32 / 16 bf16 / 32 int8-fp8
    row_bytes = B * D * itemsize

    if row_bytes <= tile_budget:
        bc = B
        max_rows = max(pack, (tile_budget // row_bytes) // pack * pack)
        ts = S if max_rows >= S else max_rows
        if num_tcs >= 2 and S > pack:
            # Keep >= num_tcs row blocks so both v7x TensorCores stream HBM.
            ts = min(ts, _round_up(pl.cdiv(S, num_tcs), pack))
    else:
        # A single flattened row does not fit the tile budget: split the lane axis by batch.
        ts = pack if pack < S else S
        if D % 128 == 0 and B > 1:
            bc = min(B, max(1, tile_budget // (ts * D * itemsize)))
        else:
            # TODO(synk): D not a multiple of 128 with an enormous B*D row; fall back to
            # full-width rows (vmem_limit is clamped below; the compiler may spill).
            bc = B
    return ts, bc, pack


# ----------------------------------------------------------------------------- kernel


def _add_pe_kernel(x_ref, pe_ref, o_ref, *, dim_model: int, batches_per_block: int):
    # x_ref/o_ref: (TS, batches_per_block * D)    pe_ref: (TS, D), possibly wider dtype.
    pe_rows = pe_ref[...].astype(o_ref.dtype)     # in-kernel cast: free VPU work
    nb = batches_per_block

    if nb == 1:
        o_ref[...] = x_ref[...] + pe_rows
    elif dim_model % 128 == 0:
        # Per-batch chunked add: no (TS, nb*D) pe temp in VMEM, stores are >=128 lanes wide
        # (unmasked vst).
        if nb <= 64:
            for b in range(nb):
                sl = pl.ds(b * dim_model, dim_model)
                o_ref[:, sl] = x_ref[:, sl] + pe_rows
        else:
            def body(b, carry):
                start = pl.multiple_of(b * dim_model, 128)
                sl = pl.ds(start, dim_model)
                o_ref[:, sl] = x_ref[:, sl] + pe_rows
                return carry
            lax.fori_loop(0, nb, body, 0)
    else:
        # D not a multiple of 128: keep the full-block store (single unmasked-as-possible
        # store of the whole tile); tile pe along lanes in b-major order (XLU work).
        o_ref[...] = x_ref[...] + jnp.tile(pe_rows, (1, nb))


# ----------------------------------------------------------------------------- wrapper


def positional_encoding_forward(x: jnp.ndarray, pe: jnp.ndarray, *,
                                donate_x: bool = False) -> jnp.ndarray:
    """x: (S, B, D); pe: (max_seq_len, 1, D).  Returns x + pe[:S] (broadcast over batch)."""
    S, B, D = x.shape
    L = pe.shape[0]
    assert S <= L, "sequence longer than the positional-encoding buffer"
    assert pe.shape[1] == 1 and pe.shape[2] == D

    # Lane-dense 2-D views; no pre-broadcast, no wrapper-side dtype cast of pe.
    xf = x.reshape(S, B * D)
    pe2d = pe.reshape(L, D)

    itemsize = jnp.dtype(x.dtype).itemsize
    pe_itemsize = jnp.dtype(pe2d.dtype).itemsize

    vmem_cap = _vmem_capacity_bytes()
    # ~50% of VMEM for the 4 double-buffered x/out tiles -> ~8 MiB/tile on v7x,
    # ~16 MiB/tile on v5e/v6e.
    tile_budget = max(1 << 20, (vmem_cap // 2) // 4)

    ts, bc, _pack = _choose_tiling(S, B, D, itemsize, tile_budget, _num_tensorcores())

    # Single row block whose height is not a sublane multiple: trim pe to exactly S rows so
    # its block is a full-extent block (tiny one-off copy; only in this corner case).
    if ts == S and (S % 8 != 0):
        pe2d = lax.slice_in_dim(pe2d, 0, S, axis=0)

    ni = pl.cdiv(S, ts)
    nj = pl.cdiv(B, bc)

    x_tile = ts * bc * D * itemsize
    pe_tile = ts * D * pe_itemsize
    # double-buffered x-in + out, double-buffered pe, plus headroom; cap at 0.75x physical.
    vmem_need = 4 * x_tile + 2 * pe_tile + (4 << 20)
    vmem_limit = int(min(int(vmem_cap * 0.75), max(vmem_need, 32 << 20)))

    out = pl.pallas_call(
        partial(_add_pe_kernel, dim_model=D, batches_per_block=bc),
        out_shape=jax.ShapeDtypeStruct((S, B * D), x.dtype),
        grid_spec=pltpu.PrefetchScalarGridSpec(
            num_scalar_prefetch=0,
            grid=(ni, nj),                                      # rows outer, lane-chunks inner
            in_specs=[
                pl.BlockSpec((ts, bc * D), lambda i, j: (i, j)),  # x rows x batch chunk
                pl.BlockSpec((ts, D), lambda i, j: (i, 0)),       # pe rows; constant over j
            ],
            out_specs=pl.BlockSpec((ts, bc * D), lambda i, j: (i, j)),
        ),
        compiler_params=pltpu.CompilerParams(
            dimension_semantics=("parallel", "parallel"),
            vmem_limit_bytes=vmem_limit,
        ),
        input_output_aliases=({0: 0} if donate_x else {}),
    )(xf, pe2d)

    return out.reshape(S, B, D)


# ----------------------------------------------------------------------------- test


if __name__ == "__main__":
    key = jax.random.PRNGKey(0)

    # (S, B, D): original small shape; S/D not 8/128-multiples; chunked per-batch path.
    configs = [
        (8, 2, 32),     # single block, jnp.tile pe path (D < 128)
        (13, 3, 48),    # S not a multiple of 8, D not a multiple of 128
        (9, 2, 128),    # D % 128 == 0 -> chunked per-batch add path
    ]

    for seq_len, batch, dim_model in configs:
        key, sub = jax.random.split(key)
        x = jax.random.normal(sub, (seq_len, batch, dim_model), dtype=jnp.float32)
        pe = make_positional_encoding(dim_model, max_seq_len=1000)

        y = jax.block_until_ready(positional_encoding_forward(x, pe))

        ref = x + pe[:seq_len, :]
        assert y.shape == (seq_len, batch, dim_model)
        assert y.dtype == x.dtype
        assert jnp.allclose(y, ref, atol=1e-6), f"mismatch vs reference for {(seq_len, batch, dim_model)}"

    print("KERNEL_OK")
</pallas_src>

<mosaic_0001>
module attributes {stable_mosaic.version = 11 : i64} {
  func.func @_add_pe_kernel(%arg0: i32, %arg1: i32, %arg2: memref<8x64xf32, #tpu.memory_space<vmem>>, %arg3: memref<8x32xf32, #tpu.memory_space<vmem>>, %arg4: memref<8x64xf32, #tpu.memory_space<vmem>>) attributes {dimension_semantics = [#tpu.dimension_semantics<parallel>, #tpu.dimension_semantics<parallel>], iteration_bounds = array<i64: 1, 1>, scalar_prefetch = 0 : i64, scratch_operands = 0 : i64, tpu.core_type = #tpu.core_type<tc>, window_params = [{transform_indices = @transform_0, window_bounds = array<i64: 8, 64>}, {transform_indices = @transform_1, window_bounds = array<i64: 8, 32>}, {transform_indices = @transform_2, window_bounds = array<i64: 8, 64>}]} {
    %c0 = arith.constant 0 : index
    %c0_0 = arith.constant 0 : index
    %0 = vector.load %arg3[%c0, %c0_0] : memref<8x32xf32, #tpu.memory_space<vmem>>, vector<8x32xf32>
    %c0_1 = arith.constant 0 : index
    %c0_2 = arith.constant 0 : index
    %1 = vector.load %arg2[%c0_1, %c0_2] : memref<8x64xf32, #tpu.memory_space<vmem>>, vector<8x64xf32>
    %2 = tpu.concatenate %0, %0 in 1 : vector<8x32xf32>, vector<8x32xf32> -> vector<8x64xf32>
    %3 = arith.addf %1, %2 : vector<8x64xf32>
    %c0_3 = arith.constant 0 : index
    %c0_4 = arith.constant 0 : index
    %4 = vector.load %arg4[%c0_3, %c0_4] : memref<8x64xf32, #tpu.memory_space<vmem>>, vector<8x64xf32>
    tpu.vector_store %arg4[%c0_3, %c0_4], %3 {strides = array<i32>} : memref<8x64xf32, #tpu.memory_space<vmem>>, vector<8x64xf32>,
    return
  }
  func.func @transform_0(%arg0: i32, %arg1: i32) -> (i32, i32) {
    %c0_i32 = arith.constant 0 : i32
    return %arg0, %arg1 : i32, i32
  }
  func.func @transform_1(%arg0: i32, %arg1: i32) -> (i32, i32) {
    %c0_i32 = arith.constant 0 : i32
    %c0_i32_0 = arith.constant 0 : i32
    return %arg0, %c0_i32 : i32, i32
  }
  func.func @transform_2(%arg0: i32, %arg1: i32) -> (i32, i32) {
    %c0_i32 = arith.constant 0 : i32
    return %arg0, %arg1 : i32, i32
  }
}

</mosaic_0001>

<llo_original>
// kernel: tpu_custom_call.1
$region0: #{tpu_custom_call.1}
  #allocation0 [shape = 'u32[]', space=smem, size = 0x4, offset = 0x4, fixed_abs, tag = 'smem constant byte address 0x4 - core index']
  #allocation1 [shape = 'u32[144,128]{1,0:T(1,128)}', space=vmem, size = 0x12000, scoped, tag = 'internal scratch']
  %s0 = inlined_call_operand.vmem [shape: f32[8,64], index: 0, kind: input, shape index: {}]
  %s1 = inlined_call_operand.vmem [shape: f32[1000,32], index: 1, kind: input, shape index: {}]
  %s2 = inlined_call_operand.hbm [shape: f32[8,64], index: 2, kind: output, shape index: {}]
  %s3 = sld [smem:[#allocation0]]
  $region18: #{tpu_custom_call.1} parent=0
    _
  %s5 = ssub.s32 1, %s3
  %s6 = scalar_select 0, %s5, %s3
  $region1: #{tpu_custom_call.1} parent=0
    #allocation2 [shape = 'u8[4096]{0}', space=vmem, size = 0x1000, scoped, tag = 'output window, operand 0, single buffered']
    #allocation3 [shape = 's32[1]{0}', space=sflag, size = 0x4, scoped, tag = 'scoped memory for tpu_custom_call.1']
    %7 = vsyncpa [#allocation3], 0
    // Predicated region
    $region2: #{tpu_custom_call.1} parent=1 // pred_check
      _
    $region3: #{tpu_custom_call.1} parent=1 // pred_check_branch
      %9 = sbr.rel (0) target = $region5
    $region4: #{tpu_custom_call.1} parent=1 // pred_region
      _
    $region5: #{tpu_custom_call.1} parent=1 // pred_fallthru
      _
    // Predicated region
    $region6: #{tpu_custom_call.1} parent=1 // pred_check
      _
    $region7: #{tpu_custom_call.1} parent=1 // pred_check_branch
      %11 = sbr.rel (0) target = $region9
    $region8: #{tpu_custom_call.1} parent=1 // pred_region
      _
    $region9: #{tpu_custom_call.1} parent=1 // pred_fallthru
      _
    %v12 = vld [vmem:[%s1] sm:$0xff]
    %v13 = vld [vmem:[%s0] sm:$0xff]
    %15 = vrot.lane.b32.xlu0 %v12, 32
    %v16 = vpop.permute.xlu0 %15
    %vm18 = vcmask 261120
    %v19 = vsel %vm18, %v12, %v16
    %v20 = vadd.f32 %v13, %v19
    %vm21 = vcmask 523264
    %22 = vst.msk [vmem:[#allocation2] sm:$0xff] %vm21, %v20
    // Predicated region
    $region10: #{tpu_custom_call.1} parent=1 // pred_check
      _
    $region11: #{tpu_custom_call.1} parent=1 // pred_check_branch
      %24 = sbr.rel (0) target = $region13
    $region12: #{tpu_custom_call.1} parent=1 // pred_region
      %s26 = ssub.s32 128, 128
      %27 = vsyncadd [#allocation3], %s26
      %s29 = sshll.u32 [#allocation2], 4
      %s30 = int_to_ptr.vmem [resolvable:$true] %s29
      %32 = dma.vmem_to_hbm [thread:$0]  %s30, 128, %s2, [#allocation3]
    $region13: #{tpu_custom_call.1} parent=1 // pred_fallthru
      _
    // Predicated region
    $region14: #{tpu_custom_call.1} parent=1 // pred_check
      _
    $region15: #{tpu_custom_call.1} parent=1 // pred_check_branch
      %34 = sbr.rel (0) target = $region17
    $region16: #{tpu_custom_call.1} parent=1 // pred_region
      %35 = dma.done [#allocation3], 128
    $region17: #{tpu_custom_call.1} parent=1 // pred_fallthru
      _
    %36 = vsyncpa [#allocation3], 1

</llo_original>
